<compile_context>
chip_gen: v5e
topology: v5e:2x2
jax: 0.10.0
libtpu: 0.0.40
codegen_flags: <defaults>
</compile_context>

<pallas_src>
import jax
import jax.numpy as jnp
from jax import lax
from jax.experimental import pallas as pl
from jax.experimental.pallas import tpu as pltpu


def _round_up(x, m):
    return ((x + m - 1) // m) * m


def _pick_pixel_tile(P, min_tile, n_images):
    """Largest lane-dense pixel tile with modest padding waste.

    Per-step overhead is ~0.35us, so prefer big tiles (the working set at
    TP=16384 is only a few MiB, far under every generation's VMEM, v7x's
    64 MiB included).  TP is then capped so the grid keeps >= ~8 steps when
    possible so both v7x TensorCores have work and the pipeline has depth.
    """
    tp = max(128, min_tile)
    for cand in (16384, 8192, 4096, 2048, 1024, 512, 256, 128):
        if cand < min_tile:
            continue
        padded = _round_up(P, cand)
        if padded - P <= max(P // 8, 128):
            tp = cand
            break
    while tp > max(128, min_tile) and n_images * ((P + tp - 1) // tp) < 8:
        tp //= 2
    return tp


def _make_kernel(cin, wo, halo_w):
    c4 = 4 * cin

    def kernel(ph_ref, halo_ref, mask_ref, w_ref, cp_ref, o_ref):
        cur = ph_ref[0]            # (4*Cin, TP)   phase rows: [ee | eo | oo | oe]
        halo = halo_ref[0, 0]      # (4*Cin, HALO) last HALO lanes of prev tile
        tp = cur.shape[-1]

        # Lane axis = flattened output pixels p = i*Wo + j.  The 9 conv taps
        # are the phases shifted by 0 / 1 / Wo / Wo+1 lanes; the halo supplies
        # the lanes that spill past the tile's left edge (zeros for tile 0).
        big = jnp.concatenate([halo, cur], axis=1)               # (4Cin, HALO+TP)
        g1 = big[cin:3 * cin, halo_w - 1:halo_w - 1 + tp]              # [eo,oo] @ p-1
        gw = big[2 * cin:4 * cin, halo_w - wo:halo_w - wo + tp]        # [oo,oe] @ p-Wo
        gw1 = big[2 * cin:3 * cin, halo_w - wo - 1:halo_w - wo - 1 + tp]  # oo @ p-Wo-1

        # Per-lane boundary masks, precomputed in the wrapper (j!=0, i!=0, both).
        m_j = mask_ref[0:1, :]
        m_i = mask_ref[1:2, :]
        m_ij = mask_ref[2:3, :]

        # 3x3 stride-2 conv (BN scale + conv bias already folded) as 4 matmuls.
        w0 = w_ref[:, 0:c4]
        w1 = w_ref[:, c4:c4 + 2 * cin]
        ww = w_ref[:, c4 + 2 * cin:c4 + 4 * cin]
        ww1 = w_ref[:, c4 + 4 * cin:c4 + 5 * cin]
        main = jnp.dot(w0, cur, preferred_element_type=jnp.float32)
        main = main + m_j * jnp.dot(w1, g1, preferred_element_type=jnp.float32)
        main = main + m_i * jnp.dot(ww, gw, preferred_element_type=jnp.float32)
        main = main + m_ij * jnp.dot(ww1, gw1, preferred_element_type=jnp.float32)

        # MaxPool2d(2, stride=2) = max over the four unshifted phase blocks.
        pooled = jnp.maximum(
            jnp.maximum(cur[0:cin], cur[cin:2 * cin]),
            jnp.maximum(cur[2 * cin:3 * cin], cur[3 * cin:4 * cin]))

        # cat -> eval-mode BN (scale/shift) -> PReLU, one full-sublane store.
        pre = jnp.concatenate([main, pooled], axis=0)            # (Cout, TP)
        scale = cp_ref[:, 0:1]
        shift = cp_ref[:, 1:2]
        alpha = cp_ref[:, 2:3]
        y = pre * scale + shift
        y = jnp.where(y >= 0.0, y, alpha * y)
        o_ref[0] = y.astype(o_ref.dtype)

    return kernel


def downsampler_forward(x_nchw, params, *, ksize=3):
    assert ksize == 3, "fused phase-view kernel is specialized to kSize=3"
    N, Cin, H, W = x_nchw.shape
    assert H % 2 == 0 and W % 2 == 0, "stride-2 conv / 2x2 pool need even H, W"

    w, b = params["w"], params["b"]                  # (Cmain,Cin,3,3), (Cmain,)
    gamma, beta = params["gamma"], params["beta"]    # (Cout,)
    mean, var = params["mean"], params["var"]        # (Cout,)
    alpha = params["alpha"]                          # (Cout,)

    Cmain = w.shape[0]
    Cout = Cmain + Cin
    Ho, Wo = H // 2, W // 2
    P = Ho * Wo
    C4 = 4 * Cin

    x = x_nchw.astype(jnp.float32)

    # Four stride-2 phase views (== the 4 "center taps" of the old im2col), in
    # the order [ee, eo, oo, oe] so every shift-group is a contiguous row band.
    # Total bytes: exactly 1.0x the input (the 2.25x im2col tensor is gone).
    ee = x[:, :, 0::2, 0::2]
    eo = x[:, :, 0::2, 1::2]
    oe = x[:, :, 1::2, 0::2]
    oo = x[:, :, 1::2, 1::2]
    phases = jnp.concatenate([ee, eo, oo, oe], axis=1).reshape(N, C4, P)

    HALO = _round_up(Wo + 1, 128)               # lanes needed left of each tile
    TP = _pick_pixel_tile(P, HALO, N)
    P_pad = _round_up(P, TP)
    n_tiles = P_pad // TP
    if P_pad != P:
        phases = jnp.pad(phases, ((0, 0), (0, 0), (0, P_pad - P)))

    # Per-tile halo: last HALO lanes of the previous tile (zeros for tile 0).
    tails = phases.reshape(N, C4, n_tiles, TP)[:, :, :, TP - HALO:]
    halo = jnp.concatenate(
        [jnp.zeros((N, C4, 1, HALO), jnp.float32), tails[:, :, :n_tiles - 1, :]],
        axis=2)
    halo = jnp.transpose(halo, (0, 2, 1, 3))    # (N, n_tiles, C4, HALO)

    # Boundary masks per flattened pixel p = i*Wo + j, precomputed so the
    # kernel needs no iota / integer modulo: j != 0, i != 0, and both.
    p_idx = jnp.arange(P_pad, dtype=jnp.int32)
    m_j = (p_idx % Wo != 0).astype(jnp.float32)
    m_i = (p_idx >= Wo).astype(jnp.float32)
    masks = jnp.stack([m_j, m_i, m_j * m_i], axis=0)        # (3, P_pad)

    # Fold conv bias + eval-mode BatchNorm (eps=0.001, running stats) into the
    # weights / per-channel affine; PReLU alphas ride along in cparams.
    eps = 1e-3
    inv_std = gamma / jnp.sqrt(var + eps)                    # (Cout,)
    bn_shift = beta - mean * inv_std                         # (Cout,)
    w_eff = w.astype(jnp.float32) * inv_std[:Cmain, None, None, None]

    def tap(kh, kw):                                         # (Cmain, Cin)
        return w_eff[:, :, kh, kw]

    wpack = jnp.concatenate(
        [tap(1, 1), tap(1, 2), tap(2, 2), tap(2, 1),   # shift 0     : ee,eo,oo,oe
         tap(1, 0), tap(2, 0),                          # shift 1     : eo,oo
         tap(0, 2), tap(0, 1),                          # shift Wo    : oo,oe
         tap(0, 0)],                                    # shift Wo+1  : oo
        axis=1)                                          # (Cmain, 9*Cin)

    scale_vec = jnp.concatenate([jnp.ones((Cmain,), jnp.float32), inv_std[Cmain:]])
    shift_vec = jnp.concatenate(
        [b.astype(jnp.float32) * inv_std[:Cmain] + bn_shift[:Cmain],
         bn_shift[Cmain:]])
    cparams = jnp.stack([scale_vec, shift_vec, alpha.astype(jnp.float32)], axis=1)

    kernel = _make_kernel(Cin, Wo, HALO)
    grid = (N, n_tiles)

    out = pl.pallas_call(
        kernel,
        out_shape=jax.ShapeDtypeStruct((N, Cout, P_pad), jnp.float32),
        grid=grid,
        in_specs=[
            pl.BlockSpec((1, C4, TP), lambda n, t: (n, 0, t)),
            pl.BlockSpec((1, 1, C4, HALO), lambda n, t: (n, t, 0, 0)),
            pl.BlockSpec((3, TP), lambda n, t: (0, t)),
            pl.BlockSpec((Cmain, 9 * Cin), lambda n, t: (0, 0)),
            pl.BlockSpec((Cout, 3), lambda n, t: (0, 0)),
        ],
        out_specs=pl.BlockSpec((1, Cout, TP), lambda n, t: (n, 0, t)),
        compiler_params=pltpu.CompilerParams(
            dimension_semantics=("parallel", "parallel"),
            vmem_limit_bytes=32 * 1024 * 1024,
        ),
    )(phases, halo, masks, wpack, cparams)

    if P_pad != P:
        out = out[:, :, :P]
    # (N, Cout, P) -> NCHW is a free reshape (no transpose).
    return out.reshape(N, Cout, Ho, Wo)


def reference_forward(x_nchw, params, *, ksize=3):
    """Pure-JAX reference (eval-mode forward) for correctness checking."""
    w, b = params["w"], params["b"]
    gamma, beta = params["gamma"], params["beta"]
    mean, var = params["mean"], params["var"]
    alpha = params["alpha"]
    pad = (ksize - 1) // 2
    eps = 1e-3

    x_nhwc = jnp.transpose(x_nchw, (0, 2, 3, 1)).astype(jnp.float32)
    w_hwio = jnp.transpose(w, (2, 3, 1, 0))
    main = lax.conv_general_dilated(
        x_nhwc, w_hwio, window_strides=(2, 2),
        padding=[(pad, pad), (pad, pad)],
        dimension_numbers=("NHWC", "HWIO", "NHWC")) + b
    other = lax.reduce_window(
        x_nhwc, -jnp.inf, lax.max,
        window_dimensions=(1, 2, 2, 1), window_strides=(1, 2, 2, 1),
        padding="VALID")
    y = jnp.concatenate([main, other], axis=-1)
    y = (y - mean) / jnp.sqrt(var + eps) * gamma + beta
    y = jnp.where(y >= 0.0, y, alpha * y)
    return jnp.transpose(y, (0, 3, 1, 2))


if __name__ == "__main__":
    # downsampler(inChannel=4, outChannel=8, kSize=3, dropout=0.1, prelus=True)
    N, Cin, H, W = 2, 4, 16, 16
    Cout, kS = 8, 3
    Cmain = Cout - Cin

    key = jax.random.PRNGKey(0)
    ks = jax.random.split(key, 7)
    x = jax.random.normal(ks[0], (N, Cin, H, W), jnp.float32)
    params = dict(
        w=0.1 * jax.random.normal(ks[1], (Cmain, Cin, kS, kS), jnp.float32),
        b=0.1 * jax.random.normal(ks[2], (Cmain,), jnp.float32),
        gamma=1.0 + 0.1 * jax.random.normal(ks[3], (Cout,), jnp.float32),
        beta=0.1 * jax.random.normal(ks[4], (Cout,), jnp.float32),
        mean=0.1 * jax.random.normal(ks[5], (Cout,), jnp.float32),
        var=0.5 + jnp.abs(jax.random.normal(ks[6], (Cout,), jnp.float32)),
        alpha=0.25 * jnp.ones((Cout,), jnp.float32),   # PReLU default init
    )

    fwd = jax.jit(lambda xx, pp: downsampler_forward(xx, pp, ksize=kS))
    y = jax.block_until_ready(fwd(x, params))

    assert y.shape == (N, Cout, H // 2, W // 2), y.shape
    y_ref = reference_forward(x, params, ksize=kS)
    assert jnp.allclose(y, y_ref, atol=1e-4, rtol=1e-4), (
        float(jnp.max(jnp.abs(y - y_ref))))

    print("KERNEL_OK")
</pallas_src>

<mosaic_0001>
module attributes {stable_mosaic.version = 11 : i64} {
  func.func @kernel(%arg0: i32, %arg1: i32, %arg2: memref<1x16x128xf32, #tpu.memory_space<vmem>>, %arg3: memref<1x1x16x128xf32, #tpu.memory_space<vmem>>, %arg4: memref<3x128xf32, #tpu.memory_space<vmem>>, %arg5: memref<4x36xf32, #tpu.memory_space<vmem>>, %arg6: memref<8x3xf32, #tpu.memory_space<vmem>>, %arg7: memref<1x8x128xf32, #tpu.memory_space<vmem>>) attributes {dimension_semantics = [#tpu.dimension_semantics<parallel>, #tpu.dimension_semantics<parallel>], iteration_bounds = array<i64: 2, 1>, scalar_prefetch = 0 : i64, scratch_operands = 0 : i64, tpu.core_type = #tpu.core_type<tc>, window_params = [{transform_indices = @transform_0, window_bounds = array<i64: 1, 16, 128>}, {transform_indices = @transform_1, window_bounds = array<i64: 1, 1, 16, 128>}, {transform_indices = @transform_2, window_bounds = array<i64: 3, 128>}, {pipeline_mode = #tpu.pipeline_mode<synchronous>, transform_indices = @transform_3, window_bounds = array<i64: 4, 36>}, {pipeline_mode = #tpu.pipeline_mode<synchronous>, transform_indices = @transform_4, window_bounds = array<i64: 8, 3>}, {transform_indices = @transform_5, window_bounds = array<i64: 1, 8, 128>}]} {
    %c0 = arith.constant 0 : index
    %c0_0 = arith.constant 0 : index
    %c0_1 = arith.constant 0 : index
    %0 = vector.load %arg2[%c0, %c0_0, %c0_1] : memref<1x16x128xf32, #tpu.memory_space<vmem>>, vector<1x16x128xf32>
    %1 = vector.shape_cast %0 : vector<1x16x128xf32> to vector<16x128xf32>
    %c0_2 = arith.constant 0 : index
    %c0_3 = arith.constant 0 : index
    %c0_4 = arith.constant 0 : index
    %c0_5 = arith.constant 0 : index
    %2 = vector.load %arg3[%c0_2, %c0_3, %c0_4, %c0_5] : memref<1x1x16x128xf32, #tpu.memory_space<vmem>>, vector<1x1x16x128xf32>
    %3 = vector.shape_cast %2 : vector<1x1x16x128xf32> to vector<16x128xf32>
    %4 = tpu.concatenate %3, %1 in 1 : vector<16x128xf32>, vector<16x128xf32> -> vector<16x256xf32>
    %5 = vector.extract_strided_slice %4 {offsets = [4, 127], sizes = [8, 128], strides = [1, 1]} : vector<16x256xf32> to vector<8x128xf32>
    %6 = vector.extract_strided_slice %4 {offsets = [8, 120], sizes = [8, 128], strides = [1, 1]} : vector<16x256xf32> to vector<8x128xf32>
    %7 = vector.extract_strided_slice %4 {offsets = [8, 119], sizes = [4, 128], strides = [1, 1]} : vector<16x256xf32> to vector<4x128xf32>
    %c0_6 = arith.constant 0 : index
    %c0_7 = arith.constant 0 : index
    %8 = vector.load %arg4[%c0_6, %c0_7] : memref<3x128xf32, #tpu.memory_space<vmem>>, vector<1x128xf32>
    %c1 = arith.constant 1 : index
    %c0_8 = arith.constant 0 : index
    %9 = vector.load %arg4[%c1, %c0_8] : memref<3x128xf32, #tpu.memory_space<vmem>>, vector<1x128xf32>
    %c2 = arith.constant 2 : index
    %c0_9 = arith.constant 0 : index
    %10 = vector.load %arg4[%c2, %c0_9] : memref<3x128xf32, #tpu.memory_space<vmem>>, vector<1x128xf32>
    %c0_10 = arith.constant 0 : index
    %c0_11 = arith.constant 0 : index
    %11 = vector.load %arg5[%c0_10, %c0_11] : memref<4x36xf32, #tpu.memory_space<vmem>>, vector<4x16xf32>
    %c0_12 = arith.constant 0 : index
    %c16 = arith.constant 16 : index
    %12 = vector.load %arg5[%c0_12, %c16] : memref<4x36xf32, #tpu.memory_space<vmem>>, vector<4x8xf32>
    %c0_13 = arith.constant 0 : index
    %c24 = arith.constant 24 : index
    %13 = vector.load %arg5[%c0_13, %c24] : memref<4x36xf32, #tpu.memory_space<vmem>>, vector<4x8xf32>
    %c0_14 = arith.constant 0 : index
    %c32 = arith.constant 32 : index
    %14 = vector.load %arg5[%c0_14, %c32] : memref<4x36xf32, #tpu.memory_space<vmem>>, vector<4x4xf32>
    %cst = arith.constant dense<0.000000e+00> : vector<4x128xf32>
    %15 = tpu.matmul %11, %1, %cst {dimension_numbers = #tpu.dot_dimension_numbers<[1], [0], [0], [1], [0, 0, 1, 1], [], []>} : vector<4x16xf32>, vector<16x128xf32>, vector<4x128xf32> -> vector<4x128xf32>
    %cst_15 = arith.constant dense<0.000000e+00> : vector<4x128xf32>
    %16 = tpu.matmul %12, %5, %cst_15 {dimension_numbers = #tpu.dot_dimension_numbers<[1], [0], [0], [1], [0, 0, 1, 1], [], []>} : vector<4x8xf32>, vector<8x128xf32>, vector<4x128xf32> -> vector<4x128xf32>
    %17 = vector.broadcast %8 : vector<1x128xf32> to vector<4x128xf32>
    %18 = arith.mulf %17, %16 : vector<4x128xf32>
    %19 = arith.addf %15, %18 : vector<4x128xf32>
    %cst_16 = arith.constant dense<0.000000e+00> : vector<4x128xf32>
    %20 = tpu.matmul %13, %6, %cst_16 {dimension_numbers = #tpu.dot_dimension_numbers<[1], [0], [0], [1], [0, 0, 1, 1], [], []>} : vector<4x8xf32>, vector<8x128xf32>, vector<4x128xf32> -> vector<4x128xf32>
    %21 = vector.broadcast %9 : vector<1x128xf32> to vector<4x128xf32>
    %22 = arith.mulf %21, %20 : vector<4x128xf32>
    %23 = arith.addf %19, %22 : vector<4x128xf32>
    %cst_17 = arith.constant dense<0.000000e+00> : vector<4x128xf32>
    %24 = tpu.matmul %14, %7, %cst_17 {dimension_numbers = #tpu.dot_dimension_numbers<[1], [0], [0], [1], [0, 0, 1, 1], [], []>} : vector<4x4xf32>, vector<4x128xf32>, vector<4x128xf32> -> vector<4x128xf32>
    %25 = vector.broadcast %10 : vector<1x128xf32> to vector<4x128xf32>
    %26 = arith.mulf %25, %24 : vector<4x128xf32>
    %27 = arith.addf %23, %26 : vector<4x128xf32>
    %28 = vector.extract_strided_slice %1 {offsets = [0, 0], sizes = [4, 128], strides = [1, 1]} : vector<16x128xf32> to vector<4x128xf32>
    %29 = vector.extract_strided_slice %1 {offsets = [4, 0], sizes = [4, 128], strides = [1, 1]} : vector<16x128xf32> to vector<4x128xf32>
    %30 = arith.maximumf %28, %29 : vector<4x128xf32>
    %31 = vector.extract_strided_slice %1 {offsets = [8, 0], sizes = [4, 128], strides = [1, 1]} : vector<16x128xf32> to vector<4x128xf32>
    %32 = vector.extract_strided_slice %1 {offsets = [12, 0], sizes = [4, 128], strides = [1, 1]} : vector<16x128xf32> to vector<4x128xf32>
    %33 = arith.maximumf %31, %32 : vector<4x128xf32>
    %34 = arith.maximumf %30, %33 : vector<4x128xf32>
    %35 = tpu.concatenate %27, %34 in 0 : vector<4x128xf32>, vector<4x128xf32> -> vector<8x128xf32>
    %c0_18 = arith.constant 0 : index
    %c0_19 = arith.constant 0 : index
    %36 = vector.load %arg6[%c0_18, %c0_19] : memref<8x3xf32, #tpu.memory_space<vmem>>, vector<8x1xf32>
    %c0_20 = arith.constant 0 : index
    %c1_21 = arith.constant 1 : index
    %37 = vector.load %arg6[%c0_20, %c1_21] : memref<8x3xf32, #tpu.memory_space<vmem>>, vector<8x1xf32>
    %c0_22 = arith.constant 0 : index
    %c2_23 = arith.constant 2 : index
    %38 = vector.load %arg6[%c0_22, %c2_23] : memref<8x3xf32, #tpu.memory_space<vmem>>, vector<8x1xf32>
    %39 = vector.broadcast %36 : vector<8x1xf32> to vector<8x128xf32>
    %40 = arith.mulf %35, %39 : vector<8x128xf32>
    %41 = vector.broadcast %37 : vector<8x1xf32> to vector<8x128xf32>
    %42 = arith.addf %40, %41 : vector<8x128xf32>
    %cst_24 = arith.constant 0.000000e+00 : f32
    %43 = vector.broadcast %cst_24 : f32 to vector<8x128xf32>
    %44 = arith.cmpf oge, %42, %43 : vector<8x128xf32>
    %45 = vector.broadcast %38 : vector<8x1xf32> to vector<8x128xf32>
    %46 = arith.mulf %45, %42 : vector<8x128xf32>
    %47 = arith.select %44, %42, %46 : vector<8x128xi1>, vector<8x128xf32>
    %c0_25 = arith.constant 0 : index
    %c0_26 = arith.constant 0 : index
    %c0_27 = arith.constant 0 : index
    %48 = vector.load %arg7[%c0_25, %c0_26, %c0_27] : memref<1x8x128xf32, #tpu.memory_space<vmem>>, vector<1x8x128xf32>
    %49 = vector.shape_cast %48 : vector<1x8x128xf32> to vector<8x128xf32>
    %50 = vector.shape_cast %47 : vector<8x128xf32> to vector<1x8x128xf32>
    tpu.vector_store %arg7[%c0_25, %c0_26, %c0_27], %50 {strides = array<i32>} : memref<1x8x128xf32, #tpu.memory_space<vmem>>, vector<1x8x128xf32>,
    return
  }
  func.func @transform_0(%arg0: i32, %arg1: i32) -> (i32, i32, i32) {
    %c0_i32 = arith.constant 0 : i32
    %c0_i32_0 = arith.constant 0 : i32
    return %arg0, %c0_i32, %arg1 : i32, i32, i32
  }
  func.func @transform_1(%arg0: i32, %arg1: i32) -> (i32, i32, i32, i32) {
    %c0_i32 = arith.constant 0 : i32
    %c0_i32_0 = arith.constant 0 : i32
    %c0_i32_1 = arith.constant 0 : i32
    return %arg0, %arg1, %c0_i32, %c0_i32_0 : i32, i32, i32, i32
  }
  func.func @transform_2(%arg0: i32, %arg1: i32) -> (i32, i32) {
    %c0_i32 = arith.constant 0 : i32
    %c0_i32_0 = arith.constant 0 : i32
    return %c0_i32, %arg1 : i32, i32
  }
  func.func @transform_3(%arg0: i32, %arg1: i32) -> (i32, i32) {
    %c0_i32 = arith.constant 0 : i32
    %c0_i32_0 = arith.constant 0 : i32
    %c0_i32_1 = arith.constant 0 : i32
    return %c0_i32, %c0_i32_0 : i32, i32
  }
  func.func @transform_4(%arg0: i32, %arg1: i32) -> (i32, i32) {
    %c0_i32 = arith.constant 0 : i32
    %c0_i32_0 = arith.constant 0 : i32
    %c0_i32_1 = arith.constant 0 : i32
    return %c0_i32, %c0_i32_0 : i32, i32
  }
  func.func @transform_5(%arg0: i32, %arg1: i32) -> (i32, i32, i32) {
    %c0_i32 = arith.constant 0 : i32
    %c0_i32_0 = arith.constant 0 : i32
    return %arg0, %c0_i32, %arg1 : i32, i32, i32
  }
}

</mosaic_0001>

<llo_original>
// kernel: _lambda_.1
$region0: #{_lambda_.1}
  #allocation0 [shape = 'u32[]', space=smem, size = 0x4, offset = 0x4, fixed_abs, tag = 'smem constant byte address 0x4 - core index']
  #allocation1 [shape = 'u32[72,128]{1,0:T(1,128)}', space=vmem, size = 0x9000, scoped, tag = 'internal scratch']
  %s0 = inlined_call_operand.vmem [shape: f32[2,16,128], index: 0, kind: input, shape index: {}]
  %s1 = inlined_call_operand.vmem [shape: f32[2,1,16,128], index: 1, kind: input, shape index: {}]
  %s2 = inlined_call_operand.vmem [shape: f32[3,128], index: 2, kind: input, shape index: {}]
  %s3 = inlined_call_operand.vmem [shape: f32[4,36], index: 3, kind: input, shape index: {}]
  %s4 = inlined_call_operand.vmem [shape: f32[8,3], index: 4, kind: input, shape index: {}]
  %s5 = inlined_call_operand.vmem [shape: f32[2,8,128], index: 5, kind: output, shape index: {}]
  %s6 = sld [smem:[#allocation0]]
  $region53: #{_lambda_.1} parent=0
    _
  %s8 = ssub.s32 1, %s6
  %s9 = scalar_select 0, %s8, %s6
  loop: start=0, step=1, limit=4
  $region2: #{_lambda_.1} parent=0 // loop_pre_header
    _
  $region3: #{_lambda_.1} parent=0 // loop_header
    %s11 = sphi 0, %s15
    %p12 = scmp.ge.s32.totalorder %s11, 4
    %s18 = sphi 0, %s30
    %s19 = sphi 0, %s26
    %s20 = sphi 0, %s18
    %s21 = sphi 0, %s19
    %s22 = sphi 0, %s20
    %s23 = sphi 0, %s21
    %s35 = sphi 0, %s37
    %s38 = sphi 0, %s35
    %s39 = sphi 0, %s38
    %s55 = sphi 0, %s39
    %s63 = sphi 0, %s65
    %s66 = sphi 0, %s63
    %s67 = sphi 0, %s66
    %s83 = sphi 0, %s67
    %s89 = sphi 0, %s91
    %s92 = sphi 0, %s89
    %s93 = sphi 0, %s92
    %s109 = sphi 0, %s93
    %s113 = sphi 0, %s113
    %s115 = sphi 0, %s113
    %s116 = sphi 0, %s115
    %s130 = sphi 0, %s116
    %s134 = sphi 0, %s134
    %s136 = sphi 0, %s134
    %s137 = sphi 0, %s136
    %s151 = sphi 0, %s137
    %s159 = sphi 0, %s161
    %s162 = sphi 0, %s159
    %s163 = sphi 0, %s162
    %s179 = sphi 0, %s163
  $region4: #{_lambda_.1} parent=0 // loop_header_branch
    %14 = sbr.rel (%p12) target = $region8
  $region5: #{_lambda_.1} parent=0 // loop_body
    %s16 = ssub.s32 %s11, 1
    %s17 = ssub.s32 %s11, 2
    %s24 = sadd.s32 1, %s19
    %p25 = scmp.ge.s32.totalorder %s24, 1
    %s26 = scalar_select %p25, 0, %s24
    %s27 = sadd.s32 1, %s18
    %s28 = scalar_select %p25, %s27, %s18
    %p29 = scmp.ge.s32.totalorder %s28, 2
    %s30 = scalar_select %p29, 0, %s28
    %s31 = ssub.s32 %s18, %s30
    %s32 = ssub.s32 %s19, %s26
    %s33 = sor.u32 %s31, %s32
    %p34 = scmp.eq.s32.totalorder %s33, 0
    %s36 = sadd.s32 %s35, 1
    %s37 = scalar_select %p34, %s35, %s36
    %p40 = pneg %p34
    %p41 = scmp.eq.s32.totalorder %s11, 1
    %p42 = por %p40, %p41
    %p43 = scmp.ne.s32.totalorder %s35, %s38
    %p44 = scmp.eq.s32.totalorder %s11, 0
    %p45 = por %p43, %p44
    %p46 = scmp.ne.s32.totalorder %s35, %s38
    %p47 = scmp.eq.s32.totalorder %s16, 1
    %p48 = por %p46, %p47
    %p49 = scmp.ne.s32.totalorder %s38, %s39
    %p50 = scmp.eq.s32.totalorder %s16, 0
    %p51 = por %p49, %p50
    %p52 = scmp.ne.s32.totalorder %s38, %s39
    %p53 = scmp.eq.s32.totalorder %s17, 1
    %p54 = por %p52, %p53
    %p56 = scmp.ne.s32.totalorder %s39, %s55
    %p57 = scmp.eq.s32.totalorder %s17, 0
    %p58 = por %p56, %p57
    %s59 = ssub.s32 %s18, %s30
    %s60 = ssub.s32 %s19, %s26
    %s61 = sor.u32 %s59, %s60
    %p62 = scmp.eq.s32.totalorder %s61, 0
    %s64 = sadd.s32 %s63, 1
    %s65 = scalar_select %p62, %s63, %s64
    %p68 = pneg %p62
    %p69 = scmp.eq.s32.totalorder %s11, 1
    %p70 = por %p68, %p69
    %p71 = scmp.ne.s32.totalorder %s63, %s66
    %p72 = scmp.eq.s32.totalorder %s11, 0
    %p73 = por %p71, %p72
    %p74 = scmp.ne.s32.totalorder %s63, %s66
    %p75 = scmp.eq.s32.totalorder %s16, 1
    %p76 = por %p74, %p75
    %p77 = scmp.ne.s32.totalorder %s66, %s67
    %p78 = scmp.eq.s32.totalorder %s16, 0
    %p79 = por %p77, %p78
    %p80 = scmp.ne.s32.totalorder %s66, %s67
    %p81 = scmp.eq.s32.totalorder %s17, 1
    %p82 = por %p80, %p81
    %p84 = scmp.ne.s32.totalorder %s67, %s83
    %p85 = scmp.eq.s32.totalorder %s17, 0
    %p86 = por %p84, %p85
    %s87 = ssub.s32 %s19, %s26
    %p88 = scmp.eq.s32.totalorder %s87, 0
    %s90 = sadd.s32 %s89, 1
    %s91 = scalar_select %p88, %s89, %s90
    %p94 = pneg %p88
    %p95 = scmp.eq.s32.totalorder %s11, 1
    %p96 = por %p94, %p95
    %p97 = scmp.ne.s32.totalorder %s89, %s92
    %p98 = scmp.eq.s32.totalorder %s11, 0
    %p99 = por %p97, %p98
    %p100 = scmp.ne.s32.totalorder %s89, %s92
    %p101 = scmp.eq.s32.totalorder %s16, 1
    %p102 = por %p100, %p101
    %p103 = scmp.ne.s32.totalorder %s92, %s93
    %p104 = scmp.eq.s32.totalorder %s16, 0
    %p105 = por %p103, %p104
    %p106 = scmp.ne.s32.totalorder %s92, %s93
    %p107 = scmp.eq.s32.totalorder %s17, 1
    %p108 = por %p106, %p107
    %p110 = scmp.ne.s32.totalorder %s93, %s109
    %p111 = scmp.eq.s32.totalorder %s17, 0
    %p112 = por %p110, %p111
    %s114 = sadd.s32 %s113, 1
    %p117 = scmp.eq.s32.totalorder %s11, 1
    %p118 = scmp.ne.s32.totalorder %s113, %s115
    %p119 = scmp.eq.s32.totalorder %s11, 0
    %p120 = por %p118, %p119
    %p121 = scmp.ne.s32.totalorder %s113, %s115
    %p122 = scmp.eq.s32.totalorder %s16, 1
    %p123 = por %p121, %p122
    %p124 = scmp.ne.s32.totalorder %s115, %s116
    %p125 = scmp.eq.s32.totalorder %s16, 0
    %p126 = por %p124, %p125
    %p127 = scmp.ne.s32.totalorder %s115, %s116
    %p128 = scmp.eq.s32.totalorder %s17, 1
    %p129 = por %p127, %p128
    %p131 = scmp.ne.s32.totalorder %s116, %s130
    %p132 = scmp.eq.s32.totalorder %s17, 0
    %p133 = por %p131, %p132
    %s135 = sadd.s32 %s134, 1
    %p138 = scmp.eq.s32.totalorder %s11, 1
    %p139 = scmp.ne.s32.totalorder %s134, %s136
    %p140 = scmp.eq.s32.totalorder %s11, 0
    %p141 = por %p139, %p140
    %p142 = scmp.ne.s32.totalorder %s134, %s136
    %p143 = scmp.eq.s32.totalorder %s16, 1
    %p144 = por %p142, %p143
    %p145 = scmp.ne.s32.totalorder %s136, %s137
    %p146 = scmp.eq.s32.totalorder %s16, 0
    %p147 = por %p145, %p146
    %p148 = scmp.ne.s32.totalorder %s136, %s137
    %p149 = scmp.eq.s32.totalorder %s17, 1
    %p150 = por %p148, %p149
    %p152 = scmp.ne.s32.totalorder %s137, %s151
    %p153 = scmp.eq.s32.totalorder %s17, 0
    %p154 = por %p152, %p153
    %s155 = ssub.s32 %s18, %s30
    %s156 = ssub.s32 %s19, %s26
    %s157 = sor.u32 %s155, %s156
    %p158 = scmp.eq.s32.totalorder %s157, 0
    %s160 = sadd.s32 %s159, 1
    %s161 = scalar_select %p158, %s159, %s160
    %p164 = pneg %p158
    %p165 = scmp.eq.s32.totalorder %s11, 1
    %p166 = por %p164, %p165
    %p167 = scmp.ne.s32.totalorder %s159, %s162
    %p168 = scmp.eq.s32.totalorder %s11, 0
    %p169 = por %p167, %p168
    %p170 = scmp.ne.s32.totalorder %s159, %s162
    %p171 = scmp.eq.s32.totalorder %s16, 1
    %p172 = por %p170, %p171
    %p173 = scmp.ne.s32.totalorder %s162, %s163
    %p174 = scmp.eq.s32.totalorder %s16, 0
    %p175 = por %p173, %p174
    %p176 = scmp.ne.s32.totalorder %s162, %s163
    %p177 = scmp.eq.s32.totalorder %s17, 1
    %p178 = por %p176, %p177
    %p180 = scmp.ne.s32.totalorder %s163, %s179
    %p181 = scmp.eq.s32.totalorder %s17, 0
    %p182 = por %p180, %p181
    %p183 = scmp.le.s32.totalorder 1, %s11
    %p184 = scmp.lt.s32.totalorder %s11, 3
    %p185 = pnand %p183, %p184
    %p186 = pneg %p185
    // Predicated region
    $region9: #{_lambda_.1} parent=5 // pred_check
      _
    $region10: #{_lambda_.1} parent=5 // pred_check_branch
      %188 = sbr.rel (%p185) target = $region12
    $region11: #{_lambda_.1} parent=5 // pred_region
      %s189 = ssub.s32 %s11, 1
      // Predicated region
      $region13: #{_lambda_.1} parent=11 // pred_check
        %p190 = pneg %p105
      $region14: #{_lambda_.1} parent=11 // pred_check_branch
        %192 = sbr.rel (%p190) target = $region16
      $region15: #{_lambda_.1} parent=11 // pred_region
        %p193 = scmp.lt.s32.totalorder %s21, 0
        %s194 = scalar_select %p193, %s21, 0
        %s195 = smul.addr %s194, 4
        %s196 = scalar_lea.vmem %s2, %s195
      $region16: #{_lambda_.1} parent=11 // pred_fallthru
        _
      // Predicated region
      $region17: #{_lambda_.1} parent=11 // pred_check
        %p197 = pneg %p126
      $region18: #{_lambda_.1} parent=11 // pred_check_branch
        %199 = sbr.rel (%p197) target = $region20
      $region19: #{_lambda_.1} parent=11 // pred_region
        _
      $region20: #{_lambda_.1} parent=11 // pred_fallthru
        _
      // Predicated region
      $region21: #{_lambda_.1} parent=11 // pred_check
        %p200 = pneg %p147
      $region22: #{_lambda_.1} parent=11 // pred_check_branch
        %202 = sbr.rel (%p200) target = $region24
      $region23: #{_lambda_.1} parent=11 // pred_region
        _
      $region24: #{_lambda_.1} parent=11 // pred_fallthru
        _
    $region12: #{_lambda_.1} parent=5 // pred_fallthru
      _
    %p203 = scmp.lt.s32.totalorder %s11, 2
    // Predicated region
    $region25: #{_lambda_.1} parent=5 // pred_check
      %p204 = pneg %p203
    $region26: #{_lambda_.1} parent=5 // pred_check_branch
      %206 = sbr.rel (%p204) target = $region28
    $region27: #{_lambda_.1} parent=5 // pred_region
      // Predicated region
      $region29: #{_lambda_.1} parent=27 // pred_check
        %p207 = pneg %p45
      $region30: #{_lambda_.1} parent=27 // pred_check_branch
        %209 = sbr.rel (%p207) target = $region32
      $region31: #{_lambda_.1} parent=27 // pred_region
        %p210 = scmp.lt.s32.totalorder %s18, 1
        %s211 = scalar_select %p210, %s18, 1
        %p212 = scmp.lt.s32.totalorder %s19, 0
        %s213 = scalar_select %p212, %s19, 0
        %s214 = smul.addr %s211, 2
        %s215 = sadd.s32 %s213, %s214
        %s216 = smul.addr %s215, 8
        %s217 = scalar_lea.vmem %s0, %s216
      $region32: #{_lambda_.1} parent=27 // pred_fallthru
        _
      // Predicated region
      $region33: #{_lambda_.1} parent=27 // pred_check
        %p218 = pneg %p73
      $region34: #{_lambda_.1} parent=27 // pred_check_branch
        %220 = sbr.rel (%p218) target = $region36
      $region35: #{_lambda_.1} parent=27 // pred_region
        %p221 = scmp.lt.s32.totalorder %s18, 1
        %s222 = scalar_select %p221, %s18, 1
        %p223 = scmp.lt.s32.totalorder %s19, 0
        %s224 = scalar_select %p223, %s19, 0
        %s225 = smul.addr %s224, 2
        %s226 = smul.addr %s222, 2
        %s227 = sadd.s32 %s225, %s226
        %s228 = smul.addr %s227, 8
        %s229 = scalar_lea.vmem %s1, %s228
      $region36: #{_lambda_.1} parent=27 // pred_fallthru
        _
    $region28: #{_lambda_.1} parent=5 // pred_fallthru
      _
    %p230 = scmp.le.s32.totalorder 1, %s11
    %p231 = scmp.lt.s32.totalorder %s11, 3
    %p232 = pnand %p230, %p231
    %p233 = pneg %p232
    // Predicated region
    $region37: #{_lambda_.1} parent=5 // pred_check
      _
    $region38: #{_lambda_.1} parent=5 // pred_check_branch
      %235 = sbr.rel (%p232) target = $region40
    $region39: #{_lambda_.1} parent=5 // pred_region
      %s236 = ssub.s32 %s11, 1
      %p237 = scmp.lt.s32.totalorder %s20, 1
      %s238 = scalar_select %p237, %s20, 1
      %p239 = scmp.lt.s32.totalorder %s21, 0
      %s240 = scalar_select %p239, %s21, 0
      %s241 = smul.addr %s238, 2
      %s242 = sadd.s32 %s240, %s241
      %s243 = smul.addr %s242, 8
      %s244 = scalar_lea.vmem %s0, %s243
      %p245 = pneg %p51
      %p246 = pneg %p48
      %p247 = scmp.lt.s32.totalorder %s20, 1
      %s248 = scalar_select %p247, %s20, 1
      %p249 = scmp.lt.s32.totalorder %s21, 0
      %s250 = scalar_select %p249, %s21, 0
      %s251 = smul.addr %s250, 2
      %s252 = smul.addr %s248, 2
      %s253 = sadd.s32 %s251, %s252
      %s254 = smul.addr %s253, 8
      %s255 = scalar_lea.vmem %s1, %s254
      %p256 = pneg %p79
      %p257 = pneg %p76
      %p258 = scmp.lt.s32.totalorder %s21, 0
      %s259 = scalar_select %p258, %s21, 0
      %s260 = smul.addr %s259, 4
      %s261 = scalar_lea.vmem %s2, %s260
      %p262 = pneg %p105
      %p263 = pneg %p102
      %p264 = pneg %p126
      %p265 = pneg %p123
      %p266 = pneg %p147
      %p267 = pneg %p144
      %p268 = pneg %p175
      %p269 = pneg %p172
      %p270 = scmp.lt.s32.totalorder %s20, 1
      %s271 = scalar_select %p270, %s20, 1
      %p272 = scmp.lt.s32.totalorder %s21, 0
      %s273 = scalar_select %p272, %s21, 0
      %s274 = sadd.s32 %s273, %s271
      %s275 = smul.addr %s274, 8
      %s276 = scalar_lea.vmem %s5, %s275
      %p277 = scmp.lt.s32.totalorder %s20, 1
      %s278 = scalar_select %p277, %s20, 1
      %p279 = scmp.lt.s32.totalorder %s21, 0
      %s280 = scalar_select %p279, %s21, 0
      %s281 = smul.addr %s278, 2
      %s282 = sadd.s32 %s280, %s281
      %s283 = smul.addr %s282, 8
      %s284 = scalar_lea.vmem %s0, %s283
      %p285 = scmp.lt.s32.totalorder %s20, 1
      %s286 = scalar_select %p285, %s20, 1
      %p287 = scmp.lt.s32.totalorder %s21, 0
      %s288 = scalar_select %p287, %s21, 0
      %s289 = smul.addr %s288, 2
      %s290 = smul.addr %s286, 2
      %s291 = sadd.s32 %s289, %s290
      %s292 = smul.addr %s291, 8
      %s293 = scalar_lea.vmem %s1, %s292
      %p294 = scmp.lt.s32.totalorder %s21, 0
      %s295 = scalar_select %p294, %s21, 0
      %s296 = smul.addr %s295, 4
      %s297 = scalar_lea.vmem %s2, %s296
      %p298 = scmp.lt.s32.totalorder %s20, 1
      %s299 = scalar_select %p298, %s20, 1
      %p300 = scmp.lt.s32.totalorder %s21, 0
      %s301 = scalar_select %p300, %s21, 0
      %s302 = sadd.s32 %s301, %s299
      %s303 = smul.addr %s302, 8
      %s304 = scalar_lea.vmem %s5, %s303
      %v305 = vld [vmem:[%s284] sm:$0xff]
      %v306 = vld [vmem:[%s284 + $0x8] sm:$0xff]
      %v307 = vld [vmem:[%s293] sm:$0xff]
      %v308 = vld [vmem:[%s293 + $0x8] sm:$0xff]
      %v309 = vld [vmem:[%s297] sm:$0x1]
      %v310 = vld [vmem:[%s297 + $0x1] sm:$0x1]
      %v311 = vld [vmem:[%s297 + $0x2] sm:$0x1]
      %v312 = vld [vmem:[%s3] sm:$0xf]
      %314 = vrot.lane.b32.xlu0 %v312, 112
      %v315 = vpop.permute.xlu0 %314
      %vm320 = vcmask 1043456
      %v321 = vrot.slane %v307, 4
      %v322 = vrot.slane %v308, 4
      %v323 = vsel %vm320, %v321, %v322
      %v324 = vrot.slane %v305, 4
      %v325 = vrot.slane %v306, 4
      %v326 = vsel %vm320, %v324, %v325
      %327 = vrot.lane.b32.xlu0 %v323, 1
      %v328 = vpop.permute.xlu0 %327
      %329 = vrot.lane.b32.xlu0 %v326, 1
      %v330 = vpop.permute.xlu0 %329
      %vm331 = vcmask 7168
      %v332 = vsel %vm331, %v328, %v330
      %vm334 = vcmask 64512
      %v335 = vsel %vm334, %v315, 0
      %337 = vmatpush.msra.mxu0 0.0
      %338 = vmatpush.msra.mxu0 0.0
      %339 = vmatpush.msra.mxu0 0.0
      %340 = vmatpush.msra.mxu0 0.0
      %341 = vmatpush.msra.mxu0 0.0
      %342 = vmatpush.msra.mxu0 0.0
      %343 = vmatpush.msra.mxu0 0.0
      %344 = vmatpush.msra.mxu0 0.0
      %345 = vmatpush.msra.mxu0 0.0
      %346 = vmatpush.msra.mxu0 0.0
      %347 = vmatpush.msra.mxu0 0.0
      %348 = vmatpush.msra.mxu0 0.0
      %349 = vmatpush.msra.mxu0 0.0
      %350 = vmatpush.msra.mxu0 0.0
      %351 = vmatpush.msra.mxu0 0.0
      %352 = vmatpush.msra.mxu0 %v332
      %353 = vmatmul.f32.gmra.mxu0 %v335
      %v354 = vpop.f32.mrf.mxu0
      %v355 = vadd.f32 0.0, %v354
      %356 = vdwg.mxu0
      %v357 = vperm.slane %v309, 0
      %v358 = vmul.f32 %v357, %v355
      %vm359 = vcmask 130048
      %v360 = vsel %vm359, %v312, 0
      %362 = vmatpush.msra.mxu0 0.0
      %363 = vmatpush.msra.mxu0 0.0
      %364 = vmatpush.msra.mxu0 0.0
      %365 = vmatpush.msra.mxu0 0.0
      %366 = vmatpush.msra.mxu0 0.0
      %367 = vmatpush.msra.mxu0 0.0
      %368 = vmatpush.msra.mxu0 0.0
      %369 = vmatpush.msra.mxu0 0.0
      %370 = vmatpush.msra.mxu0 0.0
      %371 = vmatpush.msra.mxu0 0.0
      %372 = vmatpush.msra.mxu0 0.0
      %373 = vmatpush.msra.mxu0 0.0
      %374 = vmatpush.msra.mxu0 0.0
      %375 = vmatpush.msra.mxu0 0.0
      %376 = vmatpush.msra.mxu0 %v306
      %377 = vmatpush.msra.mxu0 %v305
      %378 = vmatmul.f32.gmra.mxu0 %v360
      %v379 = vpop.f32.mrf.mxu0
      %v380 = vadd.f32 %v358, %v379
      %381 = vdwg.mxu0
      %382 = vrot.lane.b32.xlu0 %v312, 104
      %v383 = vpop.permute.xlu0 %382
      %384 = vrot.lane.b32.xlu0 %v308, 8
      %v385 = vpop.permute.xlu0 %384
      %386 = vrot.lane.b32.xlu0 %v306, 8
      %v387 = vpop.permute.xlu0 %386
      %v388 = vsel %vm334, %v385, %v387
      %v390 = vsel %vm334, %v383, 0
      %392 = vmatpush.msra.mxu0 0.0
      %393 = vmatpush.msra.mxu0 0.0
      %394 = vmatpush.msra.mxu0 0.0
      %395 = vmatpush.msra.mxu0 0.0
      %396 = vmatpush.msra.mxu0 0.0
      %397 = vmatpush.msra.mxu0 0.0
      %398 = vmatpush.msra.mxu0 0.0
      %399 = vmatpush.msra.mxu0 0.0
      %400 = vmatpush.msra.mxu0 0.0
      %401 = vmatpush.msra.mxu0 0.0
      %402 = vmatpush.msra.mxu0 0.0
      %403 = vmatpush.msra.mxu0 0.0
      %404 = vmatpush.msra.mxu0 0.0
      %405 = vmatpush.msra.mxu0 0.0
      %406 = vmatpush.msra.mxu0 0.0
      %407 = vmatpush.msra.mxu0 %v388
      %408 = vmatmul.f32.gmra.mxu0 %v390
      %v409 = vpop.f32.mrf.mxu0
      %v410 = vadd.f32 0.0, %v409
      %411 = vdwg.mxu0
      %v412 = vperm.slane %v310, 0
      %v413 = vmul.f32 %v412, %v410
      %v414 = vadd.f32 %v380, %v413
      %415 = vrot.lane.b32.xlu0 %v312, 96
      %v416 = vpop.permute.xlu0 %415
      %417 = vrot.lane.b32.xlu0 %v308, 9
      %v418 = vpop.permute.xlu0 %417
      %419 = vrot.lane.b32.xlu0 %v306, 9
      %v420 = vpop.permute.xlu0 %419
      %vm421 = vcmask 72704
      %v422 = vsel %vm421, %v418, %v420
      %vm423 = vcmask 31744
      %v424 = vsel %vm423, %v416, 0
      %v426 = vsel %vm320, %v422, 0
      %428 = vmatpush.msra.mxu0 0.0
      %429 = vmatpush.msra.mxu0 0.0
      %430 = vmatpush.msra.mxu0 0.0
      %431 = vmatpush.msra.mxu0 0.0
      %432 = vmatpush.msra.mxu0 0.0
      %433 = vmatpush.msra.mxu0 0.0
      %434 = vmatpush.msra.mxu0 0.0
      %435 = vmatpush.msra.mxu0 0.0
      %436 = vmatpush.msra.mxu0 0.0
      %437 = vmatpush.msra.mxu0 0.0
      %438 = vmatpush.msra.mxu0 0.0
      %439 = vmatpush.msra.mxu0 0.0
      %440 = vmatpush.msra.mxu0 0.0
      %441 = vmatpush.msra.mxu0 0.0
      %442 = vmatpush.msra.mxu0 0.0
      %443 = vmatpush.msra.mxu0 %v426
      %444 = vmatmul.f32.gmra.mxu0 %v424
      %v445 = vpop.f32.mrf.mxu0
      %v446 = vadd.f32 0.0, %v445
      %447 = vdwg.mxu0
      %v448 = vperm.slane %v311, 0
      %v449 = vmul.f32 %v448, %v446
      %v450 = vadd.f32 %v414, %v449
      %v452 = vmax.f32 %v305, %v324
      %v454 = vmax.f32 %v306, %v325
      %v455 = vmax.f32 %v452, %v454
      %v457 = vrot.slane %v455, 4
      %v459 = vsel %vm320, %v450, %v457
      %v460 = vld [vmem:[%s4] sm:$0xff]
      %462 = vset.pattern.permute.xlu0 0
      %463 = vperm.xlu0 %462, %v460
      %v464 = vpop.permute.xlu0 %463
      %v466 = vmul.f32 %v459, %v464
      %467 = vset.pattern.permute.xlu0 1
      %468 = vperm.xlu0 %467, %v460
      %v469 = vpop.permute.xlu0 %468
      %v471 = vadd.f32 %v466, %v469
      %vm472 = vcmp.ge.f32.partialorder %v471, 0.0
      %473 = vset.pattern.permute.xlu0 2
      %474 = vperm.xlu0 %473, %v460
      %v475 = vpop.permute.xlu0 %474
      %v477 = vmul.f32 %v475, %v471
      %v478 = vsel %vm472, %v471, %v477
      %479 = vst [vmem:[%s304] sm:$0xff] %v478
      %p480 = scmp.lt.s32.totalorder %s20, 1
      %s481 = scalar_select %p480, %s20, 1
      %p482 = scmp.lt.s32.totalorder %s21, 0
      %s483 = scalar_select %p482, %s21, 0
      %s484 = sadd.s32 %s483, %s481
      %s485 = smul.addr %s484, 8
      %s486 = scalar_lea.vmem %s5, %s485
      // Predicated region
      $region41: #{_lambda_.1} parent=39 // pred_check
        %p487 = pneg %p172
      $region42: #{_lambda_.1} parent=39 // pred_check_branch
        %489 = sbr.rel (%p487) target = $region44
      $region43: #{_lambda_.1} parent=39 // pred_region
        _
      $region44: #{_lambda_.1} parent=39 // pred_fallthru
        _
    $region40: #{_lambda_.1} parent=5 // pred_fallthru
      _
    %p490 = scmp.le.s32.totalorder 2, %s11
    // Predicated region
    $region45: #{_lambda_.1} parent=5 // pred_check
      %p491 = pneg %p490
    $region46: #{_lambda_.1} parent=5 // pred_check_branch
      %493 = sbr.rel (%p491) target = $region48
    $region47: #{_lambda_.1} parent=5 // pred_region
      %s494 = ssub.s32 %s11, 2
      // Predicated region
      $region49: #{_lambda_.1} parent=47 // pred_check
        %p495 = pneg %p178
      $region50: #{_lambda_.1} parent=47 // pred_check_branch
        %497 = sbr.rel (%p495) target = $region52
      $region51: #{_lambda_.1} parent=47 // pred_region
        %p498 = scmp.lt.s32.totalorder %s22, 1
        %s499 = scalar_select %p498, %s22, 1
        %p500 = scmp.lt.s32.totalorder %s23, 0
        %s501 = scalar_select %p500, %s23, 0
        %s502 = sadd.s32 %s501, %s499
        %s503 = smul.addr %s502, 8
        %s504 = scalar_lea.vmem %s5, %s503
      $region52: #{_lambda_.1} parent=47 // pred_fallthru
        _
    $region48: #{_lambda_.1} parent=5 // pred_fallthru
      _
  $region6: #{_lambda_.1} parent=0 // loop_footer
    %s15 = sadd.s32 1, %s11
  $region7: #{_lambda_.1} parent=0 // loop_footer_branch
    %10 = sbr.rel target = $region3
  $region8: #{_lambda_.1} parent=0 // loop_exit
    _

</llo_original>
